<compile_context>
chip_gen: v5e
topology: v5e:2x2
jax: 0.10.0
libtpu: 0.0.40
codegen_flags: <defaults>
</compile_context>

<pallas_src>
import jax
import jax.numpy as jnp
from jax import lax
from jax.experimental import pallas as pl
from jax.experimental.pallas import tpu as pltpu


def _round_up(x, m):
    return (x + m - 1) // m * m


def _make_kernel(K, dil_w, W, cout_p, id_dh, id_dw, compute_dtype):
    """Kernel body, specialized on the static conv geometry."""

    def kernel(*refs):
        tap_refs = refs[:K]                       # K x (Cin_p, Wp) padded rows
        (c_ref, ctx_ref, w_taps_ref, w_c_ref, w_h_ref, b_all_ref,
         w_rs_ref, b_rs_ref, out_ref) = refs[K:]

        # ---- filter/gate pre-activation: conv taps + c 1x1 + ctx 1x1 ----
        # All matmuls are 2-D (2*Cout_p, .) @ (., W) MXU ops with f32 acc.
        in_act = jnp.dot(w_c_ref[...], c_ref[...],
                         preferred_element_type=jnp.float32)
        in_act += jnp.dot(w_h_ref[...], ctx_ref[...],
                          preferred_element_type=jnp.float32)
        for dh in range(K):
            row = tap_refs[dh][...]               # (Cin_p, Wp), bf16/f32
            for dw in range(K):
                win = row[:, dw * dil_w:dw * dil_w + W]        # static slice
                in_act += jnp.dot(w_taps_ref[dh * K + dw], win,
                                  preferred_element_type=jnp.float32)
        in_act += b_all_ref[...]                  # summed f32 bias, (2Cp, 1)

        # ---- fused tanh/sigmoid gate (sublane-aligned split, f32) ----
        acts = jnp.tanh(in_act[:cout_p]) * jax.nn.sigmoid(in_act[cout_p:])

        # ---- res/skip 1x1 conv; multgate folded into weights/bias ----
        res_skip = jnp.dot(w_rs_ref[...], acts.astype(compute_dtype),
                           preferred_element_type=jnp.float32) + b_rs_ref[...]

        # Residual comes from the identity tap of the conv input (no separate
        # residual stream); single full-tile (2Cp, W) store.
        x_row = tap_refs[id_dh][:, id_dw * dil_w:id_dw * dil_w + W]
        res = res_skip[:cout_p] + x_row.astype(jnp.float32)
        out_ref[...] = jnp.concatenate(
            [res, res_skip[cout_p:]], axis=0).astype(out_ref.dtype)

    return kernel


def _vmem_limit_bytes(need_bytes):
    """Generation-aware scoped-VMEM budget (v7x: 64 MiB/TC, v5e/v6e: 128)."""
    try:
        kind = jax.devices()[0].device_kind.lower()
    except Exception:
        kind = ""
    if "v7" in kind:
        cap = 48 * 2**20
    elif "v5" in kind or "v6" in kind:
        cap = 100 * 2**20
    else:
        cap = 64 * 2**20
    return int(min(cap, max(32 * 2**20, 2 * need_bytes)))


def resblock_hyper_multgate_forward(x, c, ctx, multgate, params, *,
                                    kernel_size, dilation_h, dilation_w,
                                    causal=True, compute_dtype=jnp.bfloat16):
    """x: (B, Cin, H, W); c: (B, Ccin, H, W); ctx: (B, Chyp, H, W) — NCHW.

    Returns (x + res * multgate, skip), each (B, Cout, H, W) in x.dtype.
    """
    B, Cin, H, W = x.shape
    K = kernel_size
    assert K % 2 == 1, "odd kernel_size required (symmetric width padding)"
    two_c = params["b_fg"].shape[0]
    Cout = two_c // 2
    assert Cin == Cout, "module requires in_channels == out_channels"
    Ccin, Chyp = c.shape[1], ctx.shape[1]
    dil_h, dil_w = dilation_h, dilation_w
    pad_h_total = dil_h * (K - 1)
    pad_top = pad_h_total if causal else pad_h_total // 2
    pad_bot = pad_h_total - pad_top
    pad_w = dil_w * (K - 1) // 2
    Hp, Wp = H + pad_h_total, W + 2 * pad_w
    out_dtype = x.dtype
    f32 = jnp.float32

    # Channel counts padded to multiples of 8 -> aligned tanh/sigmoid split
    # and an unmasked single output store.
    cout_p = _round_up(Cout, 8)
    two_cp = 2 * cout_p
    cin_p = cout_p                                 # Cin == Cout

    # ---------------- inputs: (B, H, C, W) layout, compute dtype -------------
    # One transpose+pad+cast per input (no K^2 im2col); every per-step DMA
    # block below is then one contiguous (C, W) slab.
    xt = jnp.pad(jnp.transpose(x, (0, 2, 1, 3)),
                 ((0, 0), (pad_top, pad_bot), (0, cin_p - Cin),
                  (pad_w, pad_w))).astype(compute_dtype)       # (B,Hp,Cin_p,Wp)
    ct = jnp.transpose(c, (0, 2, 1, 3)).astype(compute_dtype)  # (B,H,Ccin,W)
    ht = jnp.transpose(ctx, (0, 2, 1, 3)).astype(compute_dtype)

    # ------------- constant-fold weights / biases (trace time, tiny) --------
    def pad_halves(w):  # (2C, ...) -> (2Cp, ...): pad each half to Cout_p rows
        pad = [(0, cout_p - Cout)] + [(0, 0)] * (w.ndim - 1)
        return jnp.concatenate(
            [jnp.pad(w[:Cout], pad), jnp.pad(w[Cout:], pad)], axis=0)

    # conv taps -> (K*K, 2Cp, Cin_p), tap index = dh*K + dw
    w_fg_p = jnp.pad(pad_halves(params["w_fg"].astype(f32)),
                     ((0, 0), (0, cin_p - Cin), (0, 0), (0, 0)))
    w_taps = jnp.transpose(w_fg_p, (2, 3, 0, 1)).reshape(
        K * K, two_cp, cin_p).astype(compute_dtype)

    w_c = pad_halves(params["w_c"].astype(f32)).astype(compute_dtype)
    w_h = pad_halves(params["w_h"].astype(f32)).astype(compute_dtype)
    b_all = pad_halves((params["b_fg"] + params["b_c"]
                        + params["b_h"]).astype(f32)).reshape(two_cp, 1)

    # res/skip 1x1: fold multgate into the res half; pad rows & columns.
    mg = jnp.broadcast_to(jnp.asarray(multgate, f32).reshape(-1), (Cout,))
    scale = jnp.concatenate([jnp.pad(mg, (0, cout_p - Cout)),
                             jnp.ones((cout_p,), f32)])
    w_rs = jnp.pad(pad_halves(params["w_rs"].astype(f32)),
                   ((0, 0), (0, cout_p - Cout)))               # (2Cp, Cout_p)
    w_rs = (w_rs * scale[:, None]).astype(compute_dtype)
    b_rs = (pad_halves(params["b_rs"].astype(f32)) * scale).reshape(two_cp, 1)

    # ------------------------------ grid / specs -----------------------------
    id_dh = K - 1 if causal else (K - 1) // 2      # identity (residual) tap
    id_dw = (K - 1) // 2
    grid = (B, H)                                  # both axes parallel (>=2)

    def tap_index_map(dh):
        def imap(b, r):
            return (b, r + dh * dil_h, 0, 0)
        return imap

    in_specs = [pl.BlockSpec((None, None, cin_p, Wp), tap_index_map(dh))
                for dh in range(K)] + [
        pl.BlockSpec((None, None, Ccin, W), lambda b, r: (b, r, 0, 0)),
        pl.BlockSpec((None, None, Chyp, W), lambda b, r: (b, r, 0, 0)),
        pl.BlockSpec((K * K, two_cp, cin_p), lambda b, r: (0, 0, 0)),
        pl.BlockSpec((two_cp, Ccin), lambda b, r: (0, 0)),
        pl.BlockSpec((two_cp, Chyp), lambda b, r: (0, 0)),
        pl.BlockSpec((two_cp, 1), lambda b, r: (0, 0)),
        pl.BlockSpec((two_cp, cout_p), lambda b, r: (0, 0)),
        pl.BlockSpec((two_cp, 1), lambda b, r: (0, 0)),
    ]
    out_spec = pl.BlockSpec((None, None, two_cp, W), lambda b, r: (b, r, 0, 0))

    # VMEM budget: double-buffered streamed I/O + weights + f32 intermediates.
    csize = jnp.dtype(compute_dtype).itemsize
    osize = jnp.dtype(out_dtype).itemsize
    stream = 2 * (K * cin_p * Wp * csize + (Ccin + Chyp) * W * csize
                  + two_cp * W * osize)
    weights = 2 * (csize * (K * K * two_cp * cin_p
                            + two_cp * (Ccin + Chyp + cout_p))
                   + 4 * two_cp * 2)
    interm = 4 * W * (2 * two_cp + 2 * cout_p)
    vmem_limit = _vmem_limit_bytes(stream + weights + interm)

    out_t = pl.pallas_call(
        _make_kernel(K, dil_w, W, cout_p, id_dh, id_dw, compute_dtype),
        out_shape=jax.ShapeDtypeStruct((B, H, two_cp, W), out_dtype),
        grid=grid,
        in_specs=in_specs,
        out_specs=out_spec,
        compiler_params=pltpu.CompilerParams(
            dimension_semantics=("parallel", "parallel"),
            vmem_limit_bytes=vmem_limit),
    )(*([xt] * K), ct, ht, w_taps, w_c, w_h, b_all, w_rs, b_rs)

    res = jnp.transpose(out_t[:, :, :Cout, :], (0, 2, 1, 3))
    skip = jnp.transpose(out_t[:, :, cout_p:cout_p + Cout, :], (0, 2, 1, 3))
    return res, skip


def reference_forward(x, c, ctx, multgate, params, *,
                      kernel_size, dilation_h, dilation_w, causal=True):
    """Pure-JAX reference reproducing the PyTorch forward (NCHW)."""
    K = kernel_size
    two_c = params["b_fg"].shape[0]
    Cout = two_c // 2
    pad_h = dilation_h * (K - 1) if causal else dilation_h * (K - 1) // 2
    pad_w = dilation_w * (K - 1) // 2
    h = lax.conv_general_dilated(
        x, params["w_fg"], (1, 1),
        [(pad_h, pad_h), (pad_w, pad_w)],
        rhs_dilation=(dilation_h, dilation_w),
        dimension_numbers=("NCHW", "OIHW", "NCHW"))
    h = h + params["b_fg"][None, :, None, None]
    if causal and pad_h != 0:
        h = h[:, :, :-pad_h, :]
    c_fg = jnp.einsum("bchw,oc->bohw", c, params["w_c"]) \
        + params["b_c"][None, :, None, None]
    ctx_fg = jnp.einsum("bchw,oc->bohw", ctx, params["w_h"]) \
        + params["b_h"][None, :, None, None]
    in_act = h + c_fg + ctx_fg
    acts = jnp.tanh(in_act[:, :Cout]) * jax.nn.sigmoid(in_act[:, Cout:])
    res_skip = jnp.einsum("bchw,oc->bohw", acts, params["w_rs"]) \
        + params["b_rs"][None, :, None, None]
    mg = jnp.asarray(multgate)
    mg = mg.reshape(1, -1, 1, 1) if mg.ndim > 0 else mg
    return x + res_skip[:, :Cout] * mg, res_skip[:, Cout:]


if __name__ == "__main__":
    key = jax.random.PRNGKey(0)
    B, C, H, W = 2, 4, 16, 16          # in_channels == out_channels == skip
    Ccin, Chyp, K = 6, 5, 3
    dil_h, dil_w = 2, 1
    keys = jax.random.split(key, 12)

    def kaiming(k, shape, fan_in):
        return (jnp.sqrt(2.0 / fan_in)
                * jax.random.normal(k, shape)).astype(jnp.float32)

    params = {
        "w_fg": kaiming(keys[0], (2 * C, C, K, K), C * K * K),   # conv (OIHW)
        "b_fg": 0.1 * jax.random.normal(keys[1], (2 * C,), jnp.float32),
        "w_c": kaiming(keys[2], (2 * C, Ccin), Ccin),            # 1x1 conv
        "b_c": 0.1 * jax.random.normal(keys[3], (2 * C,), jnp.float32),
        "w_h": kaiming(keys[4], (2 * C, Chyp), Chyp),            # 1x1 conv
        "b_h": 0.1 * jax.random.normal(keys[5], (2 * C,), jnp.float32),
        "w_rs": kaiming(keys[6], (2 * C, C), C),                 # 1x1 conv
        "b_rs": 0.1 * jax.random.normal(keys[7], (2 * C,), jnp.float32),
    }

    x = jax.random.normal(keys[8], (B, C, H, W), jnp.float32)
    c = jax.random.normal(keys[9], (B, Ccin, H, W), jnp.float32)
    ctx = jax.random.normal(keys[10], (B, Chyp, H, W), jnp.float32)
    multgate = jax.random.normal(keys[11], (C,), jnp.float32)

    kw = dict(kernel_size=K, dilation_h=dil_h, dilation_w=dil_w, causal=True)

    ref_out, ref_skip = reference_forward(x, c, ctx, multgate, params, **kw)

    # f32 MXU path: tight numerical check against the f32 reference.
    out32, skip32 = resblock_hyper_multgate_forward(
        x, c, ctx, multgate, params, compute_dtype=jnp.float32, **kw)
    jax.block_until_ready((out32, skip32))
    assert out32.shape == (B, C, H, W) and skip32.shape == (B, C, H, W)
    assert jnp.allclose(out32, ref_out, atol=1e-3, rtol=1e-3)
    assert jnp.allclose(skip32, ref_skip, atol=1e-3, rtol=1e-3)

    # Default bf16 MXU path: compare against a bf16-quantized-input reference
    # (epilogue still f32 in both) and loosely against the exact reference.
    out_bf, skip_bf = resblock_hyper_multgate_forward(
        x, c, ctx, multgate, params, **kw)
    jax.block_until_ready((out_bf, skip_bf))

    q = lambda a: a.astype(jnp.bfloat16).astype(jnp.float32)
    params_q = {k: (q(v) if k.startswith("w_") else v)
                for k, v in params.items()}
    ref_out_q, ref_skip_q = reference_forward(q(x), q(c), q(ctx), multgate,
                                              params_q, **kw)
    assert jnp.allclose(out_bf, ref_out_q, atol=3e-2, rtol=3e-2)
    assert jnp.allclose(skip_bf, ref_skip_q, atol=3e-2, rtol=3e-2)
    assert jnp.allclose(out_bf, ref_out, atol=2e-1, rtol=1e-1)
    assert jnp.allclose(skip_bf, ref_skip, atol=2e-1, rtol=1e-1)

    print("KERNEL_OK")
</pallas_src>

<mosaic_0001>
module attributes {stable_mosaic.version = 11 : i64} {
  func.func @kernel(%arg0: i32, %arg1: i32, %arg2: memref<1x1x8x18xf32, #tpu.memory_space<vmem>>, %arg3: memref<1x1x8x18xf32, #tpu.memory_space<vmem>>, %arg4: memref<1x1x8x18xf32, #tpu.memory_space<vmem>>, %arg5: memref<1x1x6x16xf32, #tpu.memory_space<vmem>>, %arg6: memref<1x1x5x16xf32, #tpu.memory_space<vmem>>, %arg7: memref<9x16x8xf32, #tpu.memory_space<vmem>>, %arg8: memref<16x6xf32, #tpu.memory_space<vmem>>, %arg9: memref<16x5xf32, #tpu.memory_space<vmem>>, %arg10: memref<16x1xf32, #tpu.memory_space<vmem>>, %arg11: memref<16x8xf32, #tpu.memory_space<vmem>>, %arg12: memref<16x1xf32, #tpu.memory_space<vmem>>, %arg13: memref<1x1x16x16xf32, #tpu.memory_space<vmem>>) attributes {dimension_semantics = [#tpu.dimension_semantics<parallel>, #tpu.dimension_semantics<parallel>], iteration_bounds = array<i64: 2, 16>, scalar_prefetch = 0 : i64, scratch_operands = 0 : i64, tpu.core_type = #tpu.core_type<tc>, window_params = [{transform_indices = @transform_0, window_bounds = array<i64: 1, 1, 8, 18>}, {transform_indices = @transform_1, window_bounds = array<i64: 1, 1, 8, 18>}, {transform_indices = @transform_2, window_bounds = array<i64: 1, 1, 8, 18>}, {transform_indices = @transform_3, window_bounds = array<i64: 1, 1, 6, 16>}, {transform_indices = @transform_4, window_bounds = array<i64: 1, 1, 5, 16>}, {pipeline_mode = #tpu.pipeline_mode<synchronous>, transform_indices = @transform_5, window_bounds = array<i64: 9, 16, 8>}, {pipeline_mode = #tpu.pipeline_mode<synchronous>, transform_indices = @transform_6, window_bounds = array<i64: 16, 6>}, {pipeline_mode = #tpu.pipeline_mode<synchronous>, transform_indices = @transform_7, window_bounds = array<i64: 16, 5>}, {pipeline_mode = #tpu.pipeline_mode<synchronous>, transform_indices = @transform_8, window_bounds = array<i64: 16, 1>}, {pipeline_mode = #tpu.pipeline_mode<synchronous>, transform_indices = @transform_9, window_bounds = array<i64: 16, 8>}, {pipeline_mode = #tpu.pipeline_mode<synchronous>, transform_indices = @transform_10, window_bounds = array<i64: 16, 1>}, {transform_indices = @transform_11, window_bounds = array<i64: 1, 1, 16, 16>}]} {
    %c0 = arith.constant 0 : index
    %c0_0 = arith.constant 0 : index
    %0 = vector.load %arg8[%c0, %c0_0] : memref<16x6xf32, #tpu.memory_space<vmem>>, vector<16x6xf32>
    %c0_1 = arith.constant 0 : index
    %c0_2 = arith.constant 0 : index
    %c0_3 = arith.constant 0 : index
    %c0_4 = arith.constant 0 : index
    %1 = vector.load %arg5[%c0_1, %c0_2, %c0_3, %c0_4] : memref<1x1x6x16xf32, #tpu.memory_space<vmem>>, vector<1x1x6x16xf32>
    %2 = vector.shape_cast %1 : vector<1x1x6x16xf32> to vector<6x16xf32>
    %cst = arith.constant dense<0.000000e+00> : vector<16x16xf32>
    %3 = tpu.matmul %0, %2, %cst {dimension_numbers = #tpu.dot_dimension_numbers<[1], [0], [0], [1], [0, 0, 1, 1], [], []>} : vector<16x6xf32>, vector<6x16xf32>, vector<16x16xf32> -> vector<16x16xf32>
    %c0_5 = arith.constant 0 : index
    %c0_6 = arith.constant 0 : index
    %4 = vector.load %arg9[%c0_5, %c0_6] : memref<16x5xf32, #tpu.memory_space<vmem>>, vector<16x5xf32>
    %c0_7 = arith.constant 0 : index
    %c0_8 = arith.constant 0 : index
    %c0_9 = arith.constant 0 : index
    %c0_10 = arith.constant 0 : index
    %5 = vector.load %arg6[%c0_7, %c0_8, %c0_9, %c0_10] : memref<1x1x5x16xf32, #tpu.memory_space<vmem>>, vector<1x1x5x16xf32>
    %6 = vector.shape_cast %5 : vector<1x1x5x16xf32> to vector<5x16xf32>
    %cst_11 = arith.constant dense<0.000000e+00> : vector<16x16xf32>
    %7 = tpu.matmul %4, %6, %cst_11 {dimension_numbers = #tpu.dot_dimension_numbers<[1], [0], [0], [1], [0, 0, 1, 1], [], []>} : vector<16x5xf32>, vector<5x16xf32>, vector<16x16xf32> -> vector<16x16xf32>
    %8 = arith.addf %3, %7 : vector<16x16xf32>
    %c0_12 = arith.constant 0 : index
    %c0_13 = arith.constant 0 : index
    %c0_14 = arith.constant 0 : index
    %c0_15 = arith.constant 0 : index
    %9 = vector.load %arg2[%c0_12, %c0_13, %c0_14, %c0_15] : memref<1x1x8x18xf32, #tpu.memory_space<vmem>>, vector<1x1x8x18xf32>
    %10 = vector.shape_cast %9 : vector<1x1x8x18xf32> to vector<8x18xf32>
    %11 = vector.extract_strided_slice %10 {offsets = [0, 0], sizes = [8, 16], strides = [1, 1]} : vector<8x18xf32> to vector<8x16xf32>
    %c0_16 = arith.constant 0 : index
    %c0_17 = arith.constant 0 : index
    %c0_18 = arith.constant 0 : index
    %12 = vector.load %arg7[%c0_16, %c0_17, %c0_18] : memref<9x16x8xf32, #tpu.memory_space<vmem>>, vector<1x16x8xf32>
    %13 = vector.shape_cast %12 : vector<1x16x8xf32> to vector<16x8xf32>
    %cst_19 = arith.constant dense<0.000000e+00> : vector<16x16xf32>
    %14 = tpu.matmul %13, %11, %cst_19 {dimension_numbers = #tpu.dot_dimension_numbers<[1], [0], [0], [1], [0, 0, 1, 1], [], []>} : vector<16x8xf32>, vector<8x16xf32>, vector<16x16xf32> -> vector<16x16xf32>
    %15 = arith.addf %8, %14 : vector<16x16xf32>
    %16 = vector.extract_strided_slice %10 {offsets = [0, 1], sizes = [8, 16], strides = [1, 1]} : vector<8x18xf32> to vector<8x16xf32>
    %c1 = arith.constant 1 : index
    %c0_20 = arith.constant 0 : index
    %c0_21 = arith.constant 0 : index
    %17 = vector.load %arg7[%c1, %c0_20, %c0_21] : memref<9x16x8xf32, #tpu.memory_space<vmem>>, vector<1x16x8xf32>
    %18 = vector.shape_cast %17 : vector<1x16x8xf32> to vector<16x8xf32>
    %cst_22 = arith.constant dense<0.000000e+00> : vector<16x16xf32>
    %19 = tpu.matmul %18, %16, %cst_22 {dimension_numbers = #tpu.dot_dimension_numbers<[1], [0], [0], [1], [0, 0, 1, 1], [], []>} : vector<16x8xf32>, vector<8x16xf32>, vector<16x16xf32> -> vector<16x16xf32>
    %20 = arith.addf %15, %19 : vector<16x16xf32>
    %21 = vector.extract_strided_slice %10 {offsets = [0, 2], sizes = [8, 16], strides = [1, 1]} : vector<8x18xf32> to vector<8x16xf32>
    %c2 = arith.constant 2 : index
    %c0_23 = arith.constant 0 : index
    %c0_24 = arith.constant 0 : index
    %22 = vector.load %arg7[%c2, %c0_23, %c0_24] : memref<9x16x8xf32, #tpu.memory_space<vmem>>, vector<1x16x8xf32>
    %23 = vector.shape_cast %22 : vector<1x16x8xf32> to vector<16x8xf32>
    %cst_25 = arith.constant dense<0.000000e+00> : vector<16x16xf32>
    %24 = tpu.matmul %23, %21, %cst_25 {dimension_numbers = #tpu.dot_dimension_numbers<[1], [0], [0], [1], [0, 0, 1, 1], [], []>} : vector<16x8xf32>, vector<8x16xf32>, vector<16x16xf32> -> vector<16x16xf32>
    %25 = arith.addf %20, %24 : vector<16x16xf32>
    %c0_26 = arith.constant 0 : index
    %c0_27 = arith.constant 0 : index
    %c0_28 = arith.constant 0 : index
    %c0_29 = arith.constant 0 : index
    %26 = vector.load %arg3[%c0_26, %c0_27, %c0_28, %c0_29] : memref<1x1x8x18xf32, #tpu.memory_space<vmem>>, vector<1x1x8x18xf32>
    %27 = vector.shape_cast %26 : vector<1x1x8x18xf32> to vector<8x18xf32>
    %28 = vector.extract_strided_slice %27 {offsets = [0, 0], sizes = [8, 16], strides = [1, 1]} : vector<8x18xf32> to vector<8x16xf32>
    %c3 = arith.constant 3 : index
    %c0_30 = arith.constant 0 : index
    %c0_31 = arith.constant 0 : index
    %29 = vector.load %arg7[%c3, %c0_30, %c0_31] : memref<9x16x8xf32, #tpu.memory_space<vmem>>, vector<1x16x8xf32>
    %30 = vector.shape_cast %29 : vector<1x16x8xf32> to vector<16x8xf32>
    %cst_32 = arith.constant dense<0.000000e+00> : vector<16x16xf32>
    %31 = tpu.matmul %30, %28, %cst_32 {dimension_numbers = #tpu.dot_dimension_numbers<[1], [0], [0], [1], [0, 0, 1, 1], [], []>} : vector<16x8xf32>, vector<8x16xf32>, vector<16x16xf32> -> vector<16x16xf32>
    %32 = arith.addf %25, %31 : vector<16x16xf32>
    %33 = vector.extract_strided_slice %27 {offsets = [0, 1], sizes = [8, 16], strides = [1, 1]} : vector<8x18xf32> to vector<8x16xf32>
    %c4 = arith.constant 4 : index
    %c0_33 = arith.constant 0 : index
    %c0_34 = arith.constant 0 : index
    %34 = vector.load %arg7[%c4, %c0_33, %c0_34] : memref<9x16x8xf32, #tpu.memory_space<vmem>>, vector<1x16x8xf32>
    %35 = vector.shape_cast %34 : vector<1x16x8xf32> to vector<16x8xf32>
    %cst_35 = arith.constant dense<0.000000e+00> : vector<16x16xf32>
    %36 = tpu.matmul %35, %33, %cst_35 {dimension_numbers = #tpu.dot_dimension_numbers<[1], [0], [0], [1], [0, 0, 1, 1], [], []>} : vector<16x8xf32>, vector<8x16xf32>, vector<16x16xf32> -> vector<16x16xf32>
    %37 = arith.addf %32, %36 : vector<16x16xf32>
    %38 = vector.extract_strided_slice %27 {offsets = [0, 2], sizes = [8, 16], strides = [1, 1]} : vector<8x18xf32> to vector<8x16xf32>
    %c5 = arith.constant 5 : index
    %c0_36 = arith.constant 0 : index
    %c0_37 = arith.constant 0 : index
    %39 = vector.load %arg7[%c5, %c0_36, %c0_37] : memref<9x16x8xf32, #tpu.memory_space<vmem>>, vector<1x16x8xf32>
    %40 = vector.shape_cast %39 : vector<1x16x8xf32> to vector<16x8xf32>
    %cst_38 = arith.constant dense<0.000000e+00> : vector<16x16xf32>
    %41 = tpu.matmul %40, %38, %cst_38 {dimension_numbers = #tpu.dot_dimension_numbers<[1], [0], [0], [1], [0, 0, 1, 1], [], []>} : vector<16x8xf32>, vector<8x16xf32>, vector<16x16xf32> -> vector<16x16xf32>
    %42 = arith.addf %37, %41 : vector<16x16xf32>
    %c0_39 = arith.constant 0 : index
    %c0_40 = arith.constant 0 : index
    %c0_41 = arith.constant 0 : index
    %c0_42 = arith.constant 0 : index
    %43 = vector.load %arg4[%c0_39, %c0_40, %c0_41, %c0_42] : memref<1x1x8x18xf32, #tpu.memory_space<vmem>>, vector<1x1x8x18xf32>
    %44 = vector.shape_cast %43 : vector<1x1x8x18xf32> to vector<8x18xf32>
    %45 = vector.extract_strided_slice %44 {offsets = [0, 0], sizes = [8, 16], strides = [1, 1]} : vector<8x18xf32> to vector<8x16xf32>
    %c6 = arith.constant 6 : index
    %c0_43 = arith.constant 0 : index
    %c0_44 = arith.constant 0 : index
    %46 = vector.load %arg7[%c6, %c0_43, %c0_44] : memref<9x16x8xf32, #tpu.memory_space<vmem>>, vector<1x16x8xf32>
    %47 = vector.shape_cast %46 : vector<1x16x8xf32> to vector<16x8xf32>
    %cst_45 = arith.constant dense<0.000000e+00> : vector<16x16xf32>
    %48 = tpu.matmul %47, %45, %cst_45 {dimension_numbers = #tpu.dot_dimension_numbers<[1], [0], [0], [1], [0, 0, 1, 1], [], []>} : vector<16x8xf32>, vector<8x16xf32>, vector<16x16xf32> -> vector<16x16xf32>
    %49 = arith.addf %42, %48 : vector<16x16xf32>
    %50 = vector.extract_strided_slice %44 {offsets = [0, 1], sizes = [8, 16], strides = [1, 1]} : vector<8x18xf32> to vector<8x16xf32>
    %c7 = arith.constant 7 : index
    %c0_46 = arith.constant 0 : index
    %c0_47 = arith.constant 0 : index
    %51 = vector.load %arg7[%c7, %c0_46, %c0_47] : memref<9x16x8xf32, #tpu.memory_space<vmem>>, vector<1x16x8xf32>
    %52 = vector.shape_cast %51 : vector<1x16x8xf32> to vector<16x8xf32>
    %cst_48 = arith.constant dense<0.000000e+00> : vector<16x16xf32>
    %53 = tpu.matmul %52, %50, %cst_48 {dimension_numbers = #tpu.dot_dimension_numbers<[1], [0], [0], [1], [0, 0, 1, 1], [], []>} : vector<16x8xf32>, vector<8x16xf32>, vector<16x16xf32> -> vector<16x16xf32>
    %54 = arith.addf %49, %53 : vector<16x16xf32>
    %55 = vector.extract_strided_slice %44 {offsets = [0, 2], sizes = [8, 16], strides = [1, 1]} : vector<8x18xf32> to vector<8x16xf32>
    %c8 = arith.constant 8 : index
    %c0_49 = arith.constant 0 : index
    %c0_50 = arith.constant 0 : index
    %56 = vector.load %arg7[%c8, %c0_49, %c0_50] : memref<9x16x8xf32, #tpu.memory_space<vmem>>, vector<1x16x8xf32>
    %57 = vector.shape_cast %56 : vector<1x16x8xf32> to vector<16x8xf32>
    %cst_51 = arith.constant dense<0.000000e+00> : vector<16x16xf32>
    %58 = tpu.matmul %57, %55, %cst_51 {dimension_numbers = #tpu.dot_dimension_numbers<[1], [0], [0], [1], [0, 0, 1, 1], [], []>} : vector<16x8xf32>, vector<8x16xf32>, vector<16x16xf32> -> vector<16x16xf32>
    %59 = arith.addf %54, %58 : vector<16x16xf32>
    %c0_52 = arith.constant 0 : index
    %c0_53 = arith.constant 0 : index
    %60 = vector.load %arg10[%c0_52, %c0_53] : memref<16x1xf32, #tpu.memory_space<vmem>>, vector<16x1xf32>
    %61 = vector.broadcast %60 : vector<16x1xf32> to vector<16x16xf32>
    %62 = arith.addf %59, %61 : vector<16x16xf32>
    %63 = vector.extract_strided_slice %62 {offsets = [0, 0], sizes = [8, 16], strides = [1, 1]} : vector<16x16xf32> to vector<8x16xf32>
    %64 = math.tanh %63 : vector<8x16xf32>
    %65 = vector.extract_strided_slice %62 {offsets = [8, 0], sizes = [8, 16], strides = [1, 1]} : vector<16x16xf32> to vector<8x16xf32>
    %66 = arith.negf %65 : vector<8x16xf32>
    %67 = math.exp %66 : vector<8x16xf32>
    %cst_54 = arith.constant 1.000000e+00 : f32
    %68 = vector.broadcast %cst_54 : f32 to vector<8x16xf32>
    %69 = arith.addf %68, %67 : vector<8x16xf32>
    %70 = arith.divf %68, %69 : vector<8x16xf32>
    %71 = arith.mulf %64, %70 : vector<8x16xf32>
    %c0_55 = arith.constant 0 : index
    %c0_56 = arith.constant 0 : index
    %72 = vector.load %arg11[%c0_55, %c0_56] : memref<16x8xf32, #tpu.memory_space<vmem>>, vector<16x8xf32>
    %cst_57 = arith.constant dense<0.000000e+00> : vector<16x16xf32>
    %73 = tpu.matmul %72, %71, %cst_57 {dimension_numbers = #tpu.dot_dimension_numbers<[1], [0], [0], [1], [0, 0, 1, 1], [], []>} : vector<16x8xf32>, vector<8x16xf32>, vector<16x16xf32> -> vector<16x16xf32>
    %c0_58 = arith.constant 0 : index
    %c0_59 = arith.constant 0 : index
    %74 = vector.load %arg12[%c0_58, %c0_59] : memref<16x1xf32, #tpu.memory_space<vmem>>, vector<16x1xf32>
    %75 = vector.broadcast %74 : vector<16x1xf32> to vector<16x16xf32>
    %76 = arith.addf %73, %75 : vector<16x16xf32>
    %c0_60 = arith.constant 0 : index
    %c0_61 = arith.constant 0 : index
    %c0_62 = arith.constant 0 : index
    %c1_63 = arith.constant 1 : index
    %77 = vector.load %arg4[%c0_60, %c0_61, %c0_62, %c1_63] : memref<1x1x8x18xf32, #tpu.memory_space<vmem>>, vector<1x1x8x16xf32>
    %78 = vector.shape_cast %77 : vector<1x1x8x16xf32> to vector<8x16xf32>
    %79 = vector.extract_strided_slice %76 {offsets = [0, 0], sizes = [8, 16], strides = [1, 1]} : vector<16x16xf32> to vector<8x16xf32>
    %80 = arith.addf %79, %78 : vector<8x16xf32>
    %81 = vector.extract_strided_slice %76 {offsets = [8, 0], sizes = [8, 16], strides = [1, 1]} : vector<16x16xf32> to vector<8x16xf32>
    %82 = tpu.concatenate %80, %81 in 0 : vector<8x16xf32>, vector<8x16xf32> -> vector<16x16xf32>
    %c0_64 = arith.constant 0 : index
    %c0_65 = arith.constant 0 : index
    %c0_66 = arith.constant 0 : index
    %c0_67 = arith.constant 0 : index
    %83 = vector.load %arg13[%c0_64, %c0_65, %c0_66, %c0_67] : memref<1x1x16x16xf32, #tpu.memory_space<vmem>>, vector<1x1x16x16xf32>
    %84 = vector.shape_cast %83 : vector<1x1x16x16xf32> to vector<16x16xf32>
    %85 = vector.shape_cast %82 : vector<16x16xf32> to vector<1x1x16x16xf32>
    tpu.vector_store %arg13[%c0_64, %c0_65, %c0_66, %c0_67], %85 {strides = array<i32>} : memref<1x1x16x16xf32, #tpu.memory_space<vmem>>, vector<1x1x16x16xf32>,
    return
  }
  func.func @transform_0(%arg0: i32, %arg1: i32) -> (i32, i32, i32, i32) {
    %c0_i32 = arith.constant 0 : i32
    %0 = arith.addi %arg1, %c0_i32 : i32
    %c0_i32_0 = arith.constant 0 : i32
    %c0_i32_1 = arith.constant 0 : i32
    %c0_i32_2 = arith.constant 0 : i32
    return %arg0, %0, %c0_i32_0, %c0_i32_1 : i32, i32, i32, i32
  }
  func.func @transform_1(%arg0: i32, %arg1: i32) -> (i32, i32, i32, i32) {
    %c2_i32 = arith.constant 2 : i32
    %0 = arith.addi %arg1, %c2_i32 : i32
    %c0_i32 = arith.constant 0 : i32
    %c0_i32_0 = arith.constant 0 : i32
    %c0_i32_1 = arith.constant 0 : i32
    return %arg0, %0, %c0_i32, %c0_i32_0 : i32, i32, i32, i32
  }
  func.func @transform_2(%arg0: i32, %arg1: i32) -> (i32, i32, i32, i32) {
    %c4_i32 = arith.constant 4 : i32
    %0 = arith.addi %arg1, %c4_i32 : i32
    %c0_i32 = arith.constant 0 : i32
    %c0_i32_0 = arith.constant 0 : i32
    %c0_i32_1 = arith.constant 0 : i32
    return %arg0, %0, %c0_i32, %c0_i32_0 : i32, i32, i32, i32
  }
  func.func @transform_3(%arg0: i32, %arg1: i32) -> (i32, i32, i32, i32) {
    %c0_i32 = arith.constant 0 : i32
    %c0_i32_0 = arith.constant 0 : i32
    %c0_i32_1 = arith.constant 0 : i32
    return %arg0, %arg1, %c0_i32, %c0_i32_0 : i32, i32, i32, i32
  }
  func.func @transform_4(%arg0: i32, %arg1: i32) -> (i32, i32, i32, i32) {
    %c0_i32 = arith.constant 0 : i32
    %c0_i32_0 = arith.constant 0 : i32
    %c0_i32_1 = arith.constant 0 : i32
    return %arg0, %arg1, %c0_i32, %c0_i32_0 : i32, i32, i32, i32
  }
  func.func @transform_5(%arg0: i32, %arg1: i32) -> (i32, i32, i32) {
    %c0_i32 = arith.constant 0 : i32
    %c0_i32_0 = arith.constant 0 : i32
    %c0_i32_1 = arith.constant 0 : i32
    %c0_i32_2 = arith.constant 0 : i32
    return %c0_i32, %c0_i32_0, %c0_i32_1 : i32, i32, i32
  }
  func.func @transform_6(%arg0: i32, %arg1: i32) -> (i32, i32) {
    %c0_i32 = arith.constant 0 : i32
    %c0_i32_0 = arith.constant 0 : i32
    %c0_i32_1 = arith.constant 0 : i32
    return %c0_i32, %c0_i32_0 : i32, i32
  }
  func.func @transform_7(%arg0: i32, %arg1: i32) -> (i32, i32) {
    %c0_i32 = arith.constant 0 : i32
    %c0_i32_0 = arith.constant 0 : i32
    %c0_i32_1 = arith.constant 0 : i32
    return %c0_i32, %c0_i32_0 : i32, i32
  }
  func.func @transform_8(%arg0: i32, %arg1: i32) -> (i32, i32) {
    %c0_i32 = arith.constant 0 : i32
    %c0_i32_0 = arith.constant 0 : i32
    %c0_i32_1 = arith.constant 0 : i32
    return %c0_i32, %c0_i32_0 : i32, i32
  }
  func.func @transform_9(%arg0: i32, %arg1: i32) -> (i32, i32) {
    %c0_i32 = arith.constant 0 : i32
    %c0_i32_0 = arith.constant 0 : i32
    %c0_i32_1 = arith.constant 0 : i32
    return %c0_i32, %c0_i32_0 : i32, i32
  }
  func.func @transform_10(%arg0: i32, %arg1: i32) -> (i32, i32) {
    %c0_i32 = arith.constant 0 : i32
    %c0_i32_0 = arith.constant 0 : i32
    %c0_i32_1 = arith.constant 0 : i32
    return %c0_i32, %c0_i32_0 : i32, i32
  }
  func.func @transform_11(%arg0: i32, %arg1: i32) -> (i32, i32, i32, i32) {
    %c0_i32 = arith.constant 0 : i32
    %c0_i32_0 = arith.constant 0 : i32
    %c0_i32_1 = arith.constant 0 : i32
    return %arg0, %arg1, %c0_i32, %c0_i32_0 : i32, i32, i32, i32
  }
}

</mosaic_0001>

<llo_original>
// kernel: tpu_custom_call.1
$region0: #{tpu_custom_call.1}
  #allocation0 [shape = 'u32[]', space=smem, size = 0x4, offset = 0x4, fixed_abs, tag = 'smem constant byte address 0x4 - core index']
  #allocation1 [shape = 'u32[72,128]{1,0:T(1,128)}', space=vmem, size = 0x9000, scoped, tag = 'internal scratch']
  %s0 = inlined_call_operand.vmem [shape: f32[2,20,8,18], index: 0, kind: input, shape index: {}]
  %s1 = inlined_call_operand.vmem [shape: f32[2,20,8,18], index: 1, kind: input, shape index: {}]
  %s2 = inlined_call_operand.vmem [shape: f32[2,20,8,18], index: 2, kind: input, shape index: {}]
  %s3 = inlined_call_operand.vmem [shape: f32[2,16,6,16], index: 3, kind: input, shape index: {}]
  %s4 = inlined_call_operand.vmem [shape: f32[2,16,5,16], index: 4, kind: input, shape index: {}]
  %s5 = inlined_call_operand.vmem [shape: f32[9,16,8], index: 5, kind: input, shape index: {}]
  %s6 = inlined_call_operand.vmem [shape: f32[16,6], index: 6, kind: input, shape index: {}]
  %s7 = inlined_call_operand.vmem [shape: f32[16,5], index: 7, kind: input, shape index: {}]
  %s8 = inlined_call_operand.vmem [shape: f32[16,1], index: 8, kind: input, shape index: {}]
  %s9 = inlined_call_operand.vmem [shape: f32[16,8], index: 9, kind: input, shape index: {}]
  %s10 = inlined_call_operand.vmem [shape: f32[16,1], index: 10, kind: input, shape index: {}]
  %s11 = inlined_call_operand.hbm [shape: f32[2,16,16,16], index: 11, kind: output, shape index: {}]
  %s12 = sld [smem:[#allocation0]]
  $region77: #{tpu_custom_call.1} parent=0
    _
  %s14 = ssub.s32 1, %s12
  %s15 = scalar_select 0, %s14, %s12
  $region1: #{tpu_custom_call.1} parent=0
    #allocation2 [shape = 'u8[16384]{0}', space=vmem, size = 0x4000, scoped, tag = 'output window, operand 0']
    #allocation3 [shape = 's32[2]{0}', space=sflag, size = 0x8, scoped, tag = 'scoped memory for tpu_custom_call.1']
    %16 = vsyncpa [#allocation3], 0
    %s17 = scalar_lea.sflag [#allocation3], 1
    %18 = vsyncpa %s17, 0
    loop: start=0, step=1, limit=34
    $region2: #{tpu_custom_call.1} parent=1 // loop_pre_header
      _
    $region3: #{tpu_custom_call.1} parent=1 // loop_header
      %s20 = sphi 0, %s24
      %p21 = scmp.ge.s32.totalorder %s20, 34
      %s27 = sphi 0, %s39
      %s28 = sphi 0, %s35
      %s29 = sphi 0, %s27
      %s30 = sphi 0, %s28
      %s31 = sphi 0, %s29
      %s32 = sphi 0, %s30
      %s44 = sphi 0, %s46
      %s47 = sphi 0, %s44
      %s48 = sphi 0, %s47
      %s64 = sphi 0, %s48
      %s74 = sphi 0, %s76
      %s77 = sphi 0, %s74
      %s78 = sphi 0, %s77
      %s94 = sphi 0, %s78
      %s104 = sphi 0, %s106
      %s107 = sphi 0, %s104
      %s108 = sphi 0, %s107
      %s124 = sphi 0, %s108
      %s132 = sphi 0, %s134
      %s135 = sphi 0, %s132
      %s136 = sphi 0, %s135
      %s152 = sphi 0, %s136
      %s160 = sphi 0, %s162
      %s163 = sphi 0, %s160
      %s164 = sphi 0, %s163
      %s180 = sphi 0, %s164
      %s184 = sphi 0, %s184
      %s186 = sphi 0, %s184
      %s187 = sphi 0, %s186
      %s201 = sphi 0, %s187
      %s205 = sphi 0, %s205
      %s207 = sphi 0, %s205
      %s208 = sphi 0, %s207
      %s222 = sphi 0, %s208
      %s226 = sphi 0, %s226
      %s228 = sphi 0, %s226
      %s229 = sphi 0, %s228
      %s243 = sphi 0, %s229
      %s247 = sphi 0, %s247
      %s249 = sphi 0, %s247
      %s250 = sphi 0, %s249
      %s264 = sphi 0, %s250
      %s268 = sphi 0, %s268
      %s270 = sphi 0, %s268
      %s271 = sphi 0, %s270
      %s285 = sphi 0, %s271
      %s289 = sphi 0, %s289
      %s291 = sphi 0, %s289
      %s292 = sphi 0, %s291
      %s306 = sphi 0, %s292
      %s314 = sphi 0, %s316
      %s317 = sphi 0, %s314
      %s318 = sphi 0, %s317
      %s334 = sphi 0, %s318
    $region4: #{tpu_custom_call.1} parent=1 // loop_header_branch
      %23 = sbr.rel (%p21) target = $region8
    $region5: #{tpu_custom_call.1} parent=1 // loop_body
      %s25 = ssub.s32 %s20, 1
      %s26 = ssub.s32 %s20, 2
      %s33 = sadd.s32 1, %s28
      %p34 = scmp.ge.s32.totalorder %s33, 16
      %s35 = scalar_select %p34, 0, %s33
      %s36 = sadd.s32 1, %s27
      %s37 = scalar_select %p34, %s36, %s27
      %p38 = scmp.ge.s32.totalorder %s37, 2
      %s39 = scalar_select %p38, 0, %s37
      %s40 = ssub.s32 %s27, %s39
      %s41 = ssub.s32 %s28, %s35
      %s42 = sor.u32 %s40, %s41
      %p43 = scmp.eq.s32.totalorder %s42, 0
      %s45 = sadd.s32 %s44, 1
      %s46 = scalar_select %p43, %s44, %s45
      %p49 = pneg %p43
      %p50 = scmp.eq.s32.totalorder %s20, 31
      %p51 = por %p49, %p50
      %p52 = scmp.ne.s32.totalorder %s44, %s47
      %p53 = scmp.eq.s32.totalorder %s20, 0
      %p54 = por %p52, %p53
      %p55 = scmp.ne.s32.totalorder %s44, %s47
      %p56 = scmp.eq.s32.totalorder %s25, 31
      %p57 = por %p55, %p56
      %p58 = scmp.ne.s32.totalorder %s47, %s48
      %p59 = scmp.eq.s32.totalorder %s25, 0
      %p60 = por %p58, %p59
      %p61 = scmp.ne.s32.totalorder %s47, %s48
      %p62 = scmp.eq.s32.totalorder %s26, 31
      %p63 = por %p61, %p62
      %p65 = scmp.ne.s32.totalorder %s48, %s64
      %p66 = scmp.eq.s32.totalorder %s26, 0
      %p67 = por %p65, %p66
      %s68 = sadd.s32 %s28, 2
      %s69 = sadd.s32 %s35, 2
      %s70 = ssub.s32 %s27, %s39
      %s71 = ssub.s32 %s68, %s69
      %s72 = sor.u32 %s70, %s71
      %p73 = scmp.eq.s32.totalorder %s72, 0
      %s75 = sadd.s32 %s74, 1
      %s76 = scalar_select %p73, %s74, %s75
      %p79 = pneg %p73
      %p80 = scmp.eq.s32.totalorder %s20, 31
      %p81 = por %p79, %p80
      %p82 = scmp.ne.s32.totalorder %s74, %s77
      %p83 = scmp.eq.s32.totalorder %s20, 0
      %p84 = por %p82, %p83
      %p85 = scmp.ne.s32.totalorder %s74, %s77
      %p86 = scmp.eq.s32.totalorder %s25, 31
      %p87 = por %p85, %p86
      %p88 = scmp.ne.s32.totalorder %s77, %s78
      %p89 = scmp.eq.s32.totalorder %s25, 0
      %p90 = por %p88, %p89
      %p91 = scmp.ne.s32.totalorder %s77, %s78
      %p92 = scmp.eq.s32.totalorder %s26, 31
      %p93 = por %p91, %p92
      %p95 = scmp.ne.s32.totalorder %s78, %s94
      %p96 = scmp.eq.s32.totalorder %s26, 0
      %p97 = por %p95, %p96
      %s98 = sadd.s32 %s28, 4
      %s99 = sadd.s32 %s35, 4
      %s100 = ssub.s32 %s27, %s39
      %s101 = ssub.s32 %s98, %s99
      %s102 = sor.u32 %s100, %s101
      %p103 = scmp.eq.s32.totalorder %s102, 0
      %s105 = sadd.s32 %s104, 1
      %s106 = scalar_select %p103, %s104, %s105
      %p109 = pneg %p103
      %p110 = scmp.eq.s32.totalorder %s20, 31
      %p111 = por %p109, %p110
      %p112 = scmp.ne.s32.totalorder %s104, %s107
      %p113 = scmp.eq.s32.totalorder %s20, 0
      %p114 = por %p112, %p113
      %p115 = scmp.ne.s32.totalorder %s104, %s107
      %p116 = scmp.eq.s32.totalorder %s25, 31
      %p117 = por %p115, %p116
      %p118 = scmp.ne.s32.totalorder %s107, %s108
      %p119 = scmp.eq.s32.totalorder %s25, 0
      %p120 = por %p118, %p119
      %p121 = scmp.ne.s32.totalorder %s107, %s108
      %p122 = scmp.eq.s32.totalorder %s26, 31
      %p123 = por %p121, %p122
      %p125 = scmp.ne.s32.totalorder %s108, %s124
      %p126 = scmp.eq.s32.totalorder %s26, 0
      %p127 = por %p125, %p126
      %s128 = ssub.s32 %s27, %s39
      %s129 = ssub.s32 %s28, %s35
      %s130 = sor.u32 %s128, %s129
      %p131 = scmp.eq.s32.totalorder %s130, 0
      %s133 = sadd.s32 %s132, 1
      %s134 = scalar_select %p131, %s132, %s133
      %p137 = pneg %p131
      %p138 = scmp.eq.s32.totalorder %s20, 31
      %p139 = por %p137, %p138
      %p140 = scmp.ne.s32.totalorder %s132, %s135
      %p141 = scmp.eq.s32.totalorder %s20, 0
      %p142 = por %p140, %p141
      %p143 = scmp.ne.s32.totalorder %s132, %s135
      %p144 = scmp.eq.s32.totalorder %s25, 31
      %p145 = por %p143, %p144
      %p146 = scmp.ne.s32.totalorder %s135, %s136
      %p147 = scmp.eq.s32.totalorder %s25, 0
      %p148 = por %p146, %p147
      %p149 = scmp.ne.s32.totalorder %s135, %s136
      %p150 = scmp.eq.s32.totalorder %s26, 31
      %p151 = por %p149, %p150
      %p153 = scmp.ne.s32.totalorder %s136, %s152
      %p154 = scmp.eq.s32.totalorder %s26, 0
      %p155 = por %p153, %p154
      %s156 = ssub.s32 %s27, %s39
      %s157 = ssub.s32 %s28, %s35
      %s158 = sor.u32 %s156, %s157
      %p159 = scmp.eq.s32.totalorder %s158, 0
      %s161 = sadd.s32 %s160, 1
      %s162 = scalar_select %p159, %s160, %s161
      %p165 = pneg %p159
      %p166 = scmp.eq.s32.totalorder %s20, 31
      %p167 = por %p165, %p166
      %p168 = scmp.ne.s32.totalorder %s160, %s163
      %p169 = scmp.eq.s32.totalorder %s20, 0
      %p170 = por %p168, %p169
      %p171 = scmp.ne.s32.totalorder %s160, %s163
      %p172 = scmp.eq.s32.totalorder %s25, 31
      %p173 = por %p171, %p172
      %p174 = scmp.ne.s32.totalorder %s163, %s164
      %p175 = scmp.eq.s32.totalorder %s25, 0
      %p176 = por %p174, %p175
      %p177 = scmp.ne.s32.totalorder %s163, %s164
      %p178 = scmp.eq.s32.totalorder %s26, 31
      %p179 = por %p177, %p178
      %p181 = scmp.ne.s32.totalorder %s164, %s180
      %p182 = scmp.eq.s32.totalorder %s26, 0
      %p183 = por %p181, %p182
      %s185 = sadd.s32 %s184, 1
      %p188 = scmp.eq.s32.totalorder %s20, 31
      %p189 = scmp.ne.s32.totalorder %s184, %s186
      %p190 = scmp.eq.s32.totalorder %s20, 0
      %p191 = por %p189, %p190
      %p192 = scmp.ne.s32.totalorder %s184, %s186
      %p193 = scmp.eq.s32.totalorder %s25, 31
      %p194 = por %p192, %p193
      %p195 = scmp.ne.s32.totalorder %s186, %s187
      %p196 = scmp.eq.s32.totalorder %s25, 0
      %p197 = por %p195, %p196
      %p198 = scmp.ne.s32.totalorder %s186, %s187
      %p199 = scmp.eq.s32.totalorder %s26, 31
      %p200 = por %p198, %p199
      %p202 = scmp.ne.s32.totalorder %s187, %s201
      %p203 = scmp.eq.s32.totalorder %s26, 0
      %p204 = por %p202, %p203
      %s206 = sadd.s32 %s205, 1
      %p209 = scmp.eq.s32.totalorder %s20, 31
      %p210 = scmp.ne.s32.totalorder %s205, %s207
      %p211 = scmp.eq.s32.totalorder %s20, 0
      %p212 = por %p210, %p211
      %p213 = scmp.ne.s32.totalorder %s205, %s207
      %p214 = scmp.eq.s32.totalorder %s25, 31
      %p215 = por %p213, %p214
      %p216 = scmp.ne.s32.totalorder %s207, %s208
      %p217 = scmp.eq.s32.totalorder %s25, 0
      %p218 = por %p216, %p217
      %p219 = scmp.ne.s32.totalorder %s207, %s208
      %p220 = scmp.eq.s32.totalorder %s26, 31
      %p221 = por %p219, %p220
      %p223 = scmp.ne.s32.totalorder %s208, %s222
      %p224 = scmp.eq.s32.totalorder %s26, 0
      %p225 = por %p223, %p224
      %s227 = sadd.s32 %s226, 1
      %p230 = scmp.eq.s32.totalorder %s20, 31
      %p231 = scmp.ne.s32.totalorder %s226, %s228
      %p232 = scmp.eq.s32.totalorder %s20, 0
      %p233 = por %p231, %p232
      %p234 = scmp.ne.s32.totalorder %s226, %s228
      %p235 = scmp.eq.s32.totalorder %s25, 31
      %p236 = por %p234, %p235
      %p237 = scmp.ne.s32.totalorder %s228, %s229
      %p238 = scmp.eq.s32.totalorder %s25, 0
      %p239 = por %p237, %p238
      %p240 = scmp.ne.s32.totalorder %s228, %s229
      %p241 = scmp.eq.s32.totalorder %s26, 31
      %p242 = por %p240, %p241
      %p244 = scmp.ne.s32.totalorder %s229, %s243
      %p245 = scmp.eq.s32.totalorder %s26, 0
      %p246 = por %p244, %p245
      %s248 = sadd.s32 %s247, 1
      %p251 = scmp.eq.s32.totalorder %s20, 31
      %p252 = scmp.ne.s32.totalorder %s247, %s249
      %p253 = scmp.eq.s32.totalorder %s20, 0
      %p254 = por %p252, %p253
      %p255 = scmp.ne.s32.totalorder %s247, %s249
      %p256 = scmp.eq.s32.totalorder %s25, 31
      %p257 = por %p255, %p256
      %p258 = scmp.ne.s32.totalorder %s249, %s250
      %p259 = scmp.eq.s32.totalorder %s25, 0
      %p260 = por %p258, %p259
      %p261 = scmp.ne.s32.totalorder %s249, %s250
      %p262 = scmp.eq.s32.totalorder %s26, 31
      %p263 = por %p261, %p262
      %p265 = scmp.ne.s32.totalorder %s250, %s264
      %p266 = scmp.eq.s32.totalorder %s26, 0
      %p267 = por %p265, %p266
      %s269 = sadd.s32 %s268, 1
      %p272 = scmp.eq.s32.totalorder %s20, 31
      %p273 = scmp.ne.s32.totalorder %s268, %s270
      %p274 = scmp.eq.s32.totalorder %s20, 0
      %p275 = por %p273, %p274
      %p276 = scmp.ne.s32.totalorder %s268, %s270
      %p277 = scmp.eq.s32.totalorder %s25, 31
      %p278 = por %p276, %p277
      %p279 = scmp.ne.s32.totalorder %s270, %s271
      %p280 = scmp.eq.s32.totalorder %s25, 0
      %p281 = por %p279, %p280
      %p282 = scmp.ne.s32.totalorder %s270, %s271
      %p283 = scmp.eq.s32.totalorder %s26, 31
      %p284 = por %p282, %p283
      %p286 = scmp.ne.s32.totalorder %s271, %s285
      %p287 = scmp.eq.s32.totalorder %s26, 0
      %p288 = por %p286, %p287
      %s290 = sadd.s32 %s289, 1
      %p293 = scmp.eq.s32.totalorder %s20, 31
      %p294 = scmp.ne.s32.totalorder %s289, %s291
      %p295 = scmp.eq.s32.totalorder %s20, 0
      %p296 = por %p294, %p295
      %p297 = scmp.ne.s32.totalorder %s289, %s291
      %p298 = scmp.eq.s32.totalorder %s25, 31
      %p299 = por %p297, %p298
      %p300 = scmp.ne.s32.totalorder %s291, %s292
      %p301 = scmp.eq.s32.totalorder %s25, 0
      %p302 = por %p300, %p301
      %p303 = scmp.ne.s32.totalorder %s291, %s292
      %p304 = scmp.eq.s32.totalorder %s26, 31
      %p305 = por %p303, %p304
      %p307 = scmp.ne.s32.totalorder %s292, %s306
      %p308 = scmp.eq.s32.totalorder %s26, 0
      %p309 = por %p307, %p308
      %s310 = ssub.s32 %s27, %s39
      %s311 = ssub.s32 %s28, %s35
      %s312 = sor.u32 %s310, %s311
      %p313 = scmp.eq.s32.totalorder %s312, 0
      %s315 = sadd.s32 %s314, 1
      %s316 = scalar_select %p313, %s314, %s315
      %p319 = pneg %p313
      %p320 = scmp.eq.s32.totalorder %s20, 31
      %p321 = por %p319, %p320
      %p322 = scmp.ne.s32.totalorder %s314, %s317
      %p323 = scmp.eq.s32.totalorder %s20, 0
      %p324 = por %p322, %p323
      %p325 = scmp.ne.s32.totalorder %s314, %s317
      %p326 = scmp.eq.s32.totalorder %s25, 31
      %p327 = por %p325, %p326
      %p328 = scmp.ne.s32.totalorder %s317, %s318
      %p329 = scmp.eq.s32.totalorder %s25, 0
      %p330 = por %p328, %p329
      %p331 = scmp.ne.s32.totalorder %s317, %s318
      %p332 = scmp.eq.s32.totalorder %s26, 31
      %p333 = por %p331, %p332
      %p335 = scmp.ne.s32.totalorder %s318, %s334
      %p336 = scmp.eq.s32.totalorder %s26, 0
      %p337 = por %p335, %p336
      %p338 = scmp.le.s32.totalorder 1, %s20
      %p339 = scmp.lt.s32.totalorder %s20, 33
      %p340 = pnand %p338, %p339
      %p341 = pneg %p340
      // Predicated region
      $region9: #{tpu_custom_call.1} parent=5 // pred_check
        _
      $region10: #{tpu_custom_call.1} parent=5 // pred_check_branch
        %343 = sbr.rel (%p340) target = $region12
      $region11: #{tpu_custom_call.1} parent=5 // pred_region
        %s344 = ssub.s32 %s20, 1
        // Predicated region
        $region13: #{tpu_custom_call.1} parent=11 // pred_check
          %p345 = pneg %p197
        $region14: #{tpu_custom_call.1} parent=11 // pred_check_branch
          %347 = sbr.rel (%p345) target = $region16
        $region15: #{tpu_custom_call.1} parent=11 // pred_region
          _
        $region16: #{tpu_custom_call.1} parent=11 // pred_fallthru
          _
        // Predicated region
        $region17: #{tpu_custom_call.1} parent=11 // pred_check
          %p348 = pneg %p218
        $region18: #{tpu_custom_call.1} parent=11 // pred_check_branch
          %350 = sbr.rel (%p348) target = $region20
        $region19: #{tpu_custom_call.1} parent=11 // pred_region
          _
        $region20: #{tpu_custom_call.1} parent=11 // pred_fallthru
          _
        // Predicated region
        $region21: #{tpu_custom_call.1} parent=11 // pred_check
          %p351 = pneg %p239
        $region22: #{tpu_custom_call.1} parent=11 // pred_check_branch
          %353 = sbr.rel (%p351) target = $region24
        $region23: #{tpu_custom_call.1} parent=11 // pred_region
          _
        $region24: #{tpu_custom_call.1} parent=11 // pred_fallthru
          _
        // Predicated region
        $region25: #{tpu_custom_call.1} parent=11 // pred_check
          %p354 = pneg %p260
        $region26: #{tpu_custom_call.1} parent=11 // pred_check_branch
          %356 = sbr.rel (%p354) target = $region28
        $region27: #{tpu_custom_call.1} parent=11 // pred_region
          _
        $region28: #{tpu_custom_call.1} parent=11 // pred_fallthru
          _
        // Predicated region
        $region29: #{tpu_custom_call.1} parent=11 // pred_check
          %p357 = pneg %p281
        $region30: #{tpu_custom_call.1} parent=11 // pred_check_branch
          %359 = sbr.rel (%p357) target = $region32
        $region31: #{tpu_custom_call.1} parent=11 // pred_region
          _
        $region32: #{tpu_custom_call.1} parent=11 // pred_fallthru
          _
        // Predicated region
        $region33: #{tpu_custom_call.1} parent=11 // pred_check
          %p360 = pneg %p302
        $region34: #{tpu_custom_call.1} parent=11 // pred_check_branch
          %362 = sbr.rel (%p360) target = $region36
        $region35: #{tpu_custom_call.1} parent=11 // pred_region
          _
        $region36: #{tpu_custom_call.1} parent=11 // pred_fallthru
          _
      $region12: #{tpu_custom_call.1} parent=5 // pred_fallthru
        _
      %p363 = scmp.lt.s32.totalorder %s20, 32
      // Predicated region
      $region37: #{tpu_custom_call.1} parent=5 // pred_check
        %p364 = pneg %p363
      $region38: #{tpu_custom_call.1} parent=5 // pred_check_branch
        %366 = sbr.rel (%p364) target = $region40
      $region39: #{tpu_custom_call.1} parent=5 // pred_region
        // Predicated region
        $region41: #{tpu_custom_call.1} parent=39 // pred_check
          %p367 = pneg %p54
        $region42: #{tpu_custom_call.1} parent=39 // pred_check_branch
          %369 = sbr.rel (%p367) target = $region44
        $region43: #{tpu_custom_call.1} parent=39 // pred_region
          %p370 = scmp.lt.s32.totalorder %s27, 1
          %s371 = scalar_select %p370, %s27, 1
          %p372 = scmp.lt.s32.totalorder %s28, 19
          %s373 = scalar_select %p372, %s28, 19
          %s374 = smul.addr %s371, 20
          %s375 = sadd.s32 %s373, %s374
          %s376 = smul.addr %s375, 8
          %s377 = scalar_lea.vmem %s0, %s376
        $region44: #{tpu_custom_call.1} parent=39 // pred_fallthru
          _
        // Predicated region
        $region45: #{tpu_custom_call.1} parent=39 // pred_check
          %p378 = pneg %p84
        $region46: #{tpu_custom_call.1} parent=39 // pred_check_branch
          %380 = sbr.rel (%p378) target = $region48
        $region47: #{tpu_custom_call.1} parent=39 // pred_region
          %s381 = sadd.s32 %s28, 2
          %p382 = scmp.lt.s32.totalorder %s27, 1
          %s383 = scalar_select %p382, %s27, 1
          %p384 = scmp.lt.s32.totalorder %s381, 19
          %s385 = scalar_select %p384, %s381, 19
          %s386 = smul.addr %s383, 20
          %s387 = sadd.s32 %s385, %s386
          %s388 = smul.addr %s387, 8
          %s389 = scalar_lea.vmem %s1, %s388
          %s390 = sadd.s32 %s28, 2
        $region48: #{tpu_custom_call.1} parent=39 // pred_fallthru
          _
        // Predicated region
        $region49: #{tpu_custom_call.1} parent=39 // pred_check
          %p391 = pneg %p114
        $region50: #{tpu_custom_call.1} parent=39 // pred_check_branch
          %393 = sbr.rel (%p391) target = $region52
        $region51: #{tpu_custom_call.1} parent=39 // pred_region
          %s394 = sadd.s32 %s28, 4
          %p395 = scmp.lt.s32.totalorder %s27, 1
          %s396 = scalar_select %p395, %s27, 1
          %p397 = scmp.lt.s32.totalorder %s394, 19
          %s398 = scalar_select %p397, %s394, 19
          %s399 = smul.addr %s396, 20
          %s400 = sadd.s32 %s398, %s399
          %s401 = smul.addr %s400, 8
          %s402 = scalar_lea.vmem %s2, %s401
          %s403 = sadd.s32 %s28, 4
        $region52: #{tpu_custom_call.1} parent=39 // pred_fallthru
          _
        // Predicated region
        $region53: #{tpu_custom_call.1} parent=39 // pred_check
          %p404 = pneg %p142
        $region54: #{tpu_custom_call.1} parent=39 // pred_check_branch
          %406 = sbr.rel (%p404) target = $region56
        $region55: #{tpu_custom_call.1} parent=39 // pred_region
          %p407 = scmp.lt.s32.totalorder %s27, 1
          %s408 = scalar_select %p407, %s27, 1
          %p409 = scmp.lt.s32.totalorder %s28, 15
          %s410 = scalar_select %p409, %s28, 15
          %s411 = smul.addr %s408, 16
          %s412 = sadd.s32 %s410, %s411
          %s413 = smul.addr %s412, 8
          %s414 = scalar_lea.vmem %s3, %s413
        $region56: #{tpu_custom_call.1} parent=39 // pred_fallthru
          _
        // Predicated region
        $region57: #{tpu_custom_call.1} parent=39 // pred_check
          %p415 = pneg %p170
        $region58: #{tpu_custom_call.1} parent=39 // pred_check_branch
          %417 = sbr.rel (%p415) target = $region60
        $region59: #{tpu_custom_call.1} parent=39 // pred_region
          %p418 = scmp.lt.s32.totalorder %s27, 1
          %s419 = scalar_select %p418, %s27, 1
          %p420 = scmp.lt.s32.totalorder %s28, 15
          %s421 = scalar_select %p420, %s28, 15
          %s422 = smul.addr %s419, 16
          %s423 = sadd.s32 %s421, %s422
          %s424 = smul.addr %s423, 8
          %s425 = scalar_lea.vmem %s4, %s424
        $region60: #{tpu_custom_call.1} parent=39 // pred_fallthru
          _
      $region40: #{tpu_custom_call.1} parent=5 // pred_fallthru
        _
      %p426 = scmp.le.s32.totalorder 1, %s20
      %p427 = scmp.lt.s32.totalorder %s20, 33
      %p428 = pnand %p426, %p427
      %p429 = pneg %p428
      // Predicated region
      $region61: #{tpu_custom_call.1} parent=5 // pred_check
        _
      $region62: #{tpu_custom_call.1} parent=5 // pred_check_branch
        %431 = sbr.rel (%p428) target = $region64
      $region63: #{tpu_custom_call.1} parent=5 // pred_region
        %s432 = ssub.s32 %s20, 1
        %p433 = scmp.lt.s32.totalorder %s29, 1
        %s434 = scalar_select %p433, %s29, 1
        %p435 = scmp.lt.s32.totalorder %s30, 19
        %s436 = scalar_select %p435, %s30, 19
        %s437 = smul.addr %s434, 20
        %s438 = sadd.s32 %s436, %s437
        %s439 = smul.addr %s438, 8
        %s440 = scalar_lea.vmem %s0, %s439
        %p441 = pneg %p60
        %p442 = pneg %p57
        %s443 = sadd.s32 %s30, 2
        %p444 = scmp.lt.s32.totalorder %s29, 1
        %s445 = scalar_select %p444, %s29, 1
        %p446 = scmp.lt.s32.totalorder %s443, 19
        %s447 = scalar_select %p446, %s443, 19
        %s448 = smul.addr %s445, 20
        %s449 = sadd.s32 %s447, %s448
        %s450 = smul.addr %s449, 8
        %s451 = scalar_lea.vmem %s1, %s450
        %p452 = pneg %p90
        %p453 = pneg %p87
        %s454 = sadd.s32 %s30, 4
        %p455 = scmp.lt.s32.totalorder %s29, 1
        %s456 = scalar_select %p455, %s29, 1
        %p457 = scmp.lt.s32.totalorder %s454, 19
        %s458 = scalar_select %p457, %s454, 19
        %s459 = smul.addr %s456, 20
        %s460 = sadd.s32 %s458, %s459
        %s461 = smul.addr %s460, 8
        %s462 = scalar_lea.vmem %s2, %s461
        %p463 = pneg %p120
        %p464 = pneg %p117
        %p465 = scmp.lt.s32.totalorder %s29, 1
        %s466 = scalar_select %p465, %s29, 1
        %p467 = scmp.lt.s32.totalorder %s30, 15
        %s468 = scalar_select %p467, %s30, 15
        %s469 = smul.addr %s466, 16
        %s470 = sadd.s32 %s468, %s469
        %s471 = smul.addr %s470, 8
        %s472 = scalar_lea.vmem %s3, %s471
        %p473 = pneg %p148
        %p474 = pneg %p145
        %p475 = scmp.lt.s32.totalorder %s29, 1
        %s476 = scalar_select %p475, %s29, 1
        %p477 = scmp.lt.s32.totalorder %s30, 15
        %s478 = scalar_select %p477, %s30, 15
        %s479 = smul.addr %s476, 16
        %s480 = sadd.s32 %s478, %s479
        %s481 = smul.addr %s480, 8
        %s482 = scalar_lea.vmem %s4, %s481
        %p483 = pneg %p176
        %p484 = pneg %p173
        %p485 = pneg %p197
        %p486 = pneg %p194
        %p487 = pneg %p218
        %p488 = pneg %p215
        %p489 = pneg %p239
        %p490 = pneg %p236
        %p491 = pneg %p260
        %p492 = pneg %p257
        %p493 = pneg %p281
        %p494 = pneg %p278
        %p495 = pneg %p302
        %p496 = pneg %p299
        %p497 = pneg %p330
        %p498 = pneg %p327
        %s499 = sand.u32 %s317, 1
        %s500 = scalar_lea.sflag [#allocation3], %s499
        %s501 = sand.u32 %s317, 1
        %s502 = smul.addr %s501, 16
        %s503 = scalar_lea.vmem [#allocation2], %s502
        %p504 = scmp.lt.s32.totalorder %s29, 1
        %s505 = scalar_select %p504, %s29, 1
        %p506 = scmp.lt.s32.totalorder %s30, 19
        %s507 = scalar_select %p506, %s30, 19
        %s508 = smul.addr %s505, 20
        %s509 = sadd.s32 %s507, %s508
        %s510 = smul.addr %s509, 8
        %s511 = scalar_lea.vmem %s0, %s510
        %s512 = sadd.s32 %s30, 2
        %p513 = scmp.lt.s32.totalorder %s29, 1
        %s514 = scalar_select %p513, %s29, 1
        %p515 = scmp.lt.s32.totalorder %s512, 19
        %s516 = scalar_select %p515, %s512, 19
        %s517 = smul.addr %s514, 20
        %s518 = sadd.s32 %s516, %s517
        %s519 = smul.addr %s518, 8
        %s520 = scalar_lea.vmem %s1, %s519
        %s521 = sadd.s32 %s30, 2
        %s522 = sadd.s32 %s30, 4
        %p523 = scmp.lt.s32.totalorder %s29, 1
        %s524 = scalar_select %p523, %s29, 1
        %p525 = scmp.lt.s32.totalorder %s522, 19
        %s526 = scalar_select %p525, %s522, 19
        %s527 = smul.addr %s524, 20
        %s528 = sadd.s32 %s526, %s527
        %s529 = smul.addr %s528, 8
        %s530 = scalar_lea.vmem %s2, %s529
        %s531 = sadd.s32 %s30, 4
        %p532 = scmp.lt.s32.totalorder %s29, 1
        %s533 = scalar_select %p532, %s29, 1
        %p534 = scmp.lt.s32.totalorder %s30, 15
        %s535 = scalar_select %p534, %s30, 15
        %s536 = smul.addr %s533, 16
        %s537 = sadd.s32 %s535, %s536
        %s538 = smul.addr %s537, 8
        %s539 = scalar_lea.vmem %s3, %s538
        %p540 = scmp.lt.s32.totalorder %s29, 1
        %s541 = scalar_select %p540, %s29, 1
        %p542 = scmp.lt.s32.totalorder %s30, 15
        %s543 = scalar_select %p542, %s30, 15
        %s544 = smul.addr %s541, 16
        %s545 = sadd.s32 %s543, %s544
        %s546 = smul.addr %s545, 8
        %s547 = scalar_lea.vmem %s4, %s546
        %v548 = vld [vmem:[%s6] sm:$0xff]
        %v549 = vld [vmem:[%s6 + $0x8] sm:$0xff]
        %v550 = vld [vmem:[%s539] sm:$0x3f]
        %v551 = vld [vmem:[%s7] sm:$0xff]
        %v552 = vld [vmem:[%s7 + $0x8] sm:$0xff]
        %v553 = vld [vmem:[%s547] sm:$0x1f]
        %vm554 = vcmask 39936
        %v556 = vsel %vm554, %v551, 0
        %v559 = vsel %vm554, %v552, 0
        %vm561 = vcmask 1044480
        %v563 = vsel %vm561, %v553, 0
        %565 = vmatpush.msra.mxu0 0.0
        %566 = vmatpush.msra.mxu0 0.0
        %567 = vmatpush.msra.mxu0 0.0
        %568 = vmatpush.msra.mxu0 0.0
        %569 = vmatpush.msra.mxu0 0.0
        %570 = vmatpush.msra.mxu0 0.0
        %571 = vmatpush.msra.mxu0 0.0
        %572 = vmatpush.msra.mxu0 0.0
        %573 = vmatpush.msra.mxu0 0.0
        %574 = vmatpush.msra.mxu0 0.0
        %575 = vmatpush.msra.mxu0 0.0
        %576 = vmatpush.msra.mxu0 0.0
        %577 = vmatpush.msra.mxu0 0.0
        %578 = vmatpush.msra.mxu0 0.0
        %579 = vmatpush.msra.mxu0 0.0
        %580 = vmatpush.msra.mxu0 %v563
        %581 = vmatmul.f32.gmra.mxu0 %v556
        %v582 = vpop.f32.mrf.mxu0
        %v583 = vadd.f32 0.0, %v582
        %584 = vmatmul.f32.gmra.mxu0 %v559
        %v585 = vpop.f32.mrf.mxu0
        %v586 = vadd.f32 0.0, %v585
        %587 = vdwg.mxu0
        %vm588 = vcmask 48128
        %v590 = vsel %vm588, %v548, 0
        %v593 = vsel %vm588, %v549, 0
        %vm595 = vcmask 1045504
        %v597 = vsel %vm595, %v550, 0
        %599 = vmatpush.msra.mxu0 0.0
        %600 = vmatpush.msra.mxu0 0.0
        %601 = vmatpush.msra.mxu0 0.0
        %602 = vmatpush.msra.mxu0 0.0
        %603 = vmatpush.msra.mxu0 0.0
        %604 = vmatpush.msra.mxu0 0.0
        %605 = vmatpush.msra.mxu0 0.0
        %606 = vmatpush.msra.mxu0 0.0
        %607 = vmatpush.msra.mxu0 0.0
        %608 = vmatpush.msra.mxu0 0.0
        %609 = vmatpush.msra.mxu0 0.0
        %610 = vmatpush.msra.mxu0 0.0
        %611 = vmatpush.msra.mxu0 0.0
        %612 = vmatpush.msra.mxu0 0.0
        %613 = vmatpush.msra.mxu0 0.0
        %614 = vmatpush.msra.mxu0 %v597
        %615 = vmatmul.f32.gmra.mxu0 %v590
        %v616 = vpop.f32.mrf.mxu0
        %v617 = vadd.f32 %v583, %v616
        %618 = vmatmul.f32.gmra.mxu0 %v593
        %v619 = vpop.f32.mrf.mxu0
        %v620 = vadd.f32 %v586, %v619
        %621 = vdwg.mxu0
        %v622 = vld [vmem:[%s511] sm:$0xff]
        %v623 = vld [vmem:[%s5] sm:$0xff]
        %v624 = vld [vmem:[%s5 + $0x8] sm:$0xff]
        %vm625 = vcmask 64512
        %v627 = vsel %vm625, %v623, 0
        %v630 = vsel %vm625, %v624, 0
        %632 = vmatpush.msra.mxu0 0.0
        %633 = vmatpush.msra.mxu0 0.0
        %634 = vmatpush.msra.mxu0 0.0
        %635 = vmatpush.msra.mxu0 0.0
        %636 = vmatpush.msra.mxu0 0.0
        %637 = vmatpush.msra.mxu0 0.0
        %638 = vmatpush.msra.mxu0 0.0
        %639 = vmatpush.msra.mxu0 0.0
        %640 = vmatpush.msra.mxu0 0.0
        %641 = vmatpush.msra.mxu0 0.0
        %642 = vmatpush.msra.mxu0 0.0
        %643 = vmatpush.msra.mxu0 0.0
        %644 = vmatpush.msra.mxu0 0.0
        %645 = vmatpush.msra.mxu0 0.0
        %646 = vmatpush.msra.mxu0 0.0
        %647 = vmatpush.msra.mxu0 %v622
        %648 = vmatmul.f32.gmra.mxu0 %v627
        %v649 = vpop.f32.mrf.mxu0
        %v650 = vadd.f32 0.0, %v649
        %651 = vmatmul.f32.gmra.mxu0 %v630
        %v652 = vpop.f32.mrf.mxu0
        %v653 = vadd.f32 0.0, %v652
        %654 = vdwg.mxu0
        %v655 = vadd.f32 %v617, %v650
        %v656 = vadd.f32 %v620, %v653
        %s657 = scalar_lea.vmem %s5, 16
        %v658 = vld [vmem:[%s657] sm:$0xff]
        %v659 = vld [vmem:[%s657 + $0x8] sm:$0xff]
        %661 = vrot.lane.b32.xlu0 %v622, 127
        %v662 = vpop.permute.xlu0 %661
        %v665 = vsel %vm625, %v658, 0
        %v668 = vsel %vm625, %v659, 0
        %670 = vmatpush.msra.mxu0 0.0
        %671 = vmatpush.msra.mxu0 0.0
        %672 = vmatpush.msra.mxu0 0.0
        %673 = vmatpush.msra.mxu0 0.0
        %674 = vmatpush.msra.mxu0 0.0
        %675 = vmatpush.msra.mxu0 0.0
        %676 = vmatpush.msra.mxu0 0.0
        %677 = vmatpush.msra.mxu0 0.0
        %678 = vmatpush.msra.mxu0 0.0
        %679 = vmatpush.msra.mxu0 0.0
        %680 = vmatpush.msra.mxu0 0.0
        %681 = vmatpush.msra.mxu0 0.0
        %682 = vmatpush.msra.mxu0 0.0
        %683 = vmatpush.msra.mxu0 0.0
        %684 = vmatpush.msra.mxu0 0.0
        %685 = vmatpush.msra.mxu0 %v662
        %686 = vmatmul.f32.gmra.mxu0 %v665
        %v687 = vpop.f32.mrf.mxu0
        %v688 = vadd.f32 0.0, %v687
        %689 = vmatmul.f32.gmra.mxu0 %v668
        %v690 = vpop.f32.mrf.mxu0
        %v691 = vadd.f32 0.0, %v690
        %692 = vdwg.mxu0
        %v693 = vadd.f32 %v655, %v688
        %v694 = vadd.f32 %v656, %v691
        %s695 = scalar_lea.vmem %s5, 32
        %v696 = vld [vmem:[%s695] sm:$0xff]
        %v697 = vld [vmem:[%s695 + $0x8] sm:$0xff]
        %698 = vrot.lane.b32.xlu0 %v622, 126
        %v699 = vpop.permute.xlu0 %698
        %v702 = vsel %vm625, %v696, 0
        %v705 = vsel %vm625, %v697, 0
        %707 = vmatpush.msra.mxu0 0.0
        %708 = vmatpush.msra.mxu0 0.0
        %709 = vmatpush.msra.mxu0 0.0
        %710 = vmatpush.msra.mxu0 0.0
        %711 = vmatpush.msra.mxu0 0.0
        %712 = vmatpush.msra.mxu0 0.0
        %713 = vmatpush.msra.mxu0 0.0
        %714 = vmatpush.msra.mxu0 0.0
        %715 = vmatpush.msra.mxu0 0.0
        %716 = vmatpush.msra.mxu0 0.0
        %717 = vmatpush.msra.mxu0 0.0
        %718 = vmatpush.msra.mxu0 0.0
        %719 = vmatpush.msra.mxu0 0.0
        %720 = vmatpush.msra.mxu0 0.0
        %721 = vmatpush.msra.mxu0 0.0
        %722 = vmatpush.msra.mxu0 %v699
        %723 = vmatmul.f32.gmra.mxu0 %v702
        %v724 = vpop.f32.mrf.mxu0
        %v725 = vadd.f32 0.0, %v724
        %726 = vmatmul.f32.gmra.mxu0 %v705
        %v727 = vpop.f32.mrf.mxu0
        %v728 = vadd.f32 0.0, %v727
        %729 = vdwg.mxu0
        %v730 = vadd.f32 %v693, %v725
        %v731 = vadd.f32 %v694, %v728
        %v732 = vld [vmem:[%s520] sm:$0xff]
        %s733 = scalar_lea.vmem %s5, 48
        %v734 = vld [vmem:[%s733] sm:$0xff]
        %v735 = vld [vmem:[%s733 + $0x8] sm:$0xff]
        %v737 = vsel %vm625, %v734, 0
        %v740 = vsel %vm625, %v735, 0
        %742 = vmatpush.msra.mxu0 0.0
        %743 = vmatpush.msra.mxu0 0.0
        %744 = vmatpush.msra.mxu0 0.0
        %745 = vmatpush.msra.mxu0 0.0
        %746 = vmatpush.msra.mxu0 0.0
        %747 = vmatpush.msra.mxu0 0.0
        %748 = vmatpush.msra.mxu0 0.0
        %749 = vmatpush.msra.mxu0 0.0
        %750 = vmatpush.msra.mxu0 0.0
        %751 = vmatpush.msra.mxu0 0.0
        %752 = vmatpush.msra.mxu0 0.0
        %753 = vmatpush.msra.mxu0 0.0
        %754 = vmatpush.msra.mxu0 0.0
        %755 = vmatpush.msra.mxu0 0.0
        %756 = vmatpush.msra.mxu0 0.0
        %757 = vmatpush.msra.mxu0 %v732
        %758 = vmatmul.f32.gmra.mxu0 %v737
        %v759 = vpop.f32.mrf.mxu0
        %v760 = vadd.f32 0.0, %v759
        %761 = vmatmul.f32.gmra.mxu0 %v740
        %v762 = vpop.f32.mrf.mxu0
        %v763 = vadd.f32 0.0, %v762
        %764 = vdwg.mxu0
        %v765 = vadd.f32 %v730, %v760
        %v766 = vadd.f32 %v731, %v763
        %s767 = scalar_lea.vmem %s5, 64
        %v768 = vld [vmem:[%s767] sm:$0xff]
        %v769 = vld [vmem:[%s767 + $0x8] sm:$0xff]
        %771 = vrot.lane.b32.xlu0 %v732, 127
        %v772 = vpop.permute.xlu0 %771
        %v775 = vsel %vm625, %v768, 0
        %v778 = vsel %vm625, %v769, 0
        %780 = vmatpush.msra.mxu0 0.0
        %781 = vmatpush.msra.mxu0 0.0
        %782 = vmatpush.msra.mxu0 0.0
        %783 = vmatpush.msra.mxu0 0.0
        %784 = vmatpush.msra.mxu0 0.0
        %785 = vmatpush.msra.mxu0 0.0
        %786 = vmatpush.msra.mxu0 0.0
        %787 = vmatpush.msra.mxu0 0.0
        %788 = vmatpush.msra.mxu0 0.0
        %789 = vmatpush.msra.mxu0 0.0
        %790 = vmatpush.msra.mxu0 0.0
        %791 = vmatpush.msra.mxu0 0.0
        %792 = vmatpush.msra.mxu0 0.0
        %793 = vmatpush.msra.mxu0 0.0
        %794 = vmatpush.msra.mxu0 0.0
        %795 = vmatpush.msra.mxu0 %v772
        %796 = vmatmul.f32.gmra.mxu0 %v775
        %v797 = vpop.f32.mrf.mxu0
        %v798 = vadd.f32 0.0, %v797
        %799 = vmatmul.f32.gmra.mxu0 %v778
        %v800 = vpop.f32.mrf.mxu0
        %v801 = vadd.f32 0.0, %v800
        %802 = vdwg.mxu0
        %v803 = vadd.f32 %v765, %v798
        %v804 = vadd.f32 %v766, %v801
        %s805 = scalar_lea.vmem %s5, 80
        %v806 = vld [vmem:[%s805] sm:$0xff]
        %v807 = vld [vmem:[%s805 + $0x8] sm:$0xff]
        %808 = vrot.lane.b32.xlu0 %v732, 126
        %v809 = vpop.permute.xlu0 %808
        %v812 = vsel %vm625, %v806, 0
        %v815 = vsel %vm625, %v807, 0
        %817 = vmatpush.msra.mxu0 0.0
        %818 = vmatpush.msra.mxu0 0.0
        %819 = vmatpush.msra.mxu0 0.0
        %820 = vmatpush.msra.mxu0 0.0
        %821 = vmatpush.msra.mxu0 0.0
        %822 = vmatpush.msra.mxu0 0.0
        %823 = vmatpush.msra.mxu0 0.0
        %824 = vmatpush.msra.mxu0 0.0
        %825 = vmatpush.msra.mxu0 0.0
        %826 = vmatpush.msra.mxu0 0.0
        %827 = vmatpush.msra.mxu0 0.0
        %828 = vmatpush.msra.mxu0 0.0
        %829 = vmatpush.msra.mxu0 0.0
        %830 = vmatpush.msra.mxu0 0.0
        %831 = vmatpush.msra.mxu0 0.0
        %832 = vmatpush.msra.mxu0 %v809
        %833 = vmatmul.f32.gmra.mxu0 %v812
        %v834 = vpop.f32.mrf.mxu0
        %v835 = vadd.f32 0.0, %v834
        %836 = vmatmul.f32.gmra.mxu0 %v815
        %v837 = vpop.f32.mrf.mxu0
        %v838 = vadd.f32 0.0, %v837
        %839 = vdwg.mxu0
        %v840 = vadd.f32 %v803, %v835
        %v841 = vadd.f32 %v804, %v838
        %v842 = vld [vmem:[%s530] sm:$0xff]
        %s843 = scalar_lea.vmem %s5, 96
        %v844 = vld [vmem:[%s843] sm:$0xff]
        %v845 = vld [vmem:[%s843 + $0x8] sm:$0xff]
        %v847 = vsel %vm625, %v844, 0
        %v850 = vsel %vm625, %v845, 0
        %852 = vmatpush.msra.mxu0 0.0
        %853 = vmatpush.msra.mxu0 0.0
        %854 = vmatpush.msra.mxu0 0.0
        %855 = vmatpush.msra.mxu0 0.0
        %856 = vmatpush.msra.mxu0 0.0
        %857 = vmatpush.msra.mxu0 0.0
        %858 = vmatpush.msra.mxu0 0.0
        %859 = vmatpush.msra.mxu0 0.0
        %860 = vmatpush.msra.mxu0 0.0
        %861 = vmatpush.msra.mxu0 0.0
        %862 = vmatpush.msra.mxu0 0.0
        %863 = vmatpush.msra.mxu0 0.0
        %864 = vmatpush.msra.mxu0 0.0
        %865 = vmatpush.msra.mxu0 0.0
        %866 = vmatpush.msra.mxu0 0.0
        %867 = vmatpush.msra.mxu0 %v842
        %868 = vmatmul.f32.gmra.mxu0 %v847
        %v869 = vpop.f32.mrf.mxu0
        %v870 = vadd.f32 0.0, %v869
        %871 = vmatmul.f32.gmra.mxu0 %v850
        %v872 = vpop.f32.mrf.mxu0
        %v873 = vadd.f32 0.0, %v872
        %874 = vdwg.mxu0
        %v875 = vadd.f32 %v840, %v870
        %v876 = vadd.f32 %v841, %v873
        %s877 = scalar_lea.vmem %s5, 112
        %v878 = vld [vmem:[%s877] sm:$0xff]
        %v879 = vld [vmem:[%s877 + $0x8] sm:$0xff]
        %881 = vrot.lane.b32.xlu0 %v842, 127
        %v882 = vpop.permute.xlu0 %881
        %v885 = vsel %vm625, %v878, 0
        %v888 = vsel %vm625, %v879, 0
        %890 = vmatpush.msra.mxu0 0.0
        %891 = vmatpush.msra.mxu0 0.0
        %892 = vmatpush.msra.mxu0 0.0
        %893 = vmatpush.msra.mxu0 0.0
        %894 = vmatpush.msra.mxu0 0.0
        %895 = vmatpush.msra.mxu0 0.0
        %896 = vmatpush.msra.mxu0 0.0
        %897 = vmatpush.msra.mxu0 0.0
        %898 = vmatpush.msra.mxu0 0.0
        %899 = vmatpush.msra.mxu0 0.0
        %900 = vmatpush.msra.mxu0 0.0
        %901 = vmatpush.msra.mxu0 0.0
        %902 = vmatpush.msra.mxu0 0.0
        %903 = vmatpush.msra.mxu0 0.0
        %904 = vmatpush.msra.mxu0 0.0
        %905 = vmatpush.msra.mxu0 %v882
        %906 = vmatmul.f32.gmra.mxu0 %v885
        %v907 = vpop.f32.mrf.mxu0
        %v908 = vadd.f32 0.0, %v907
        %909 = vmatmul.f32.gmra.mxu0 %v888
        %v910 = vpop.f32.mrf.mxu0
        %v911 = vadd.f32 0.0, %v910
        %912 = vdwg.mxu0
        %v913 = vadd.f32 %v875, %v908
        %v914 = vadd.f32 %v876, %v911
        %s915 = scalar_lea.vmem %s5, 128
        %v916 = vld [vmem:[%s915] sm:$0xff]
        %v917 = vld [vmem:[%s915 + $0x8] sm:$0xff]
        %918 = vrot.lane.b32.xlu0 %v842, 126
        %v919 = vpop.permute.xlu0 %918
        %v922 = vsel %vm625, %v916, 0
        %v925 = vsel %vm625, %v917, 0
        %927 = vmatpush.msra.mxu0 0.0
        %928 = vmatpush.msra.mxu0 0.0
        %929 = vmatpush.msra.mxu0 0.0
        %930 = vmatpush.msra.mxu0 0.0
        %931 = vmatpush.msra.mxu0 0.0
        %932 = vmatpush.msra.mxu0 0.0
        %933 = vmatpush.msra.mxu0 0.0
        %934 = vmatpush.msra.mxu0 0.0
        %935 = vmatpush.msra.mxu0 0.0
        %936 = vmatpush.msra.mxu0 0.0
        %937 = vmatpush.msra.mxu0 0.0
        %938 = vmatpush.msra.mxu0 0.0
        %939 = vmatpush.msra.mxu0 0.0
        %940 = vmatpush.msra.mxu0 0.0
        %941 = vmatpush.msra.mxu0 0.0
        %942 = vmatpush.msra.mxu0 %v919
        %943 = vmatmul.f32.gmra.mxu0 %v922
        %v944 = vpop.f32.mrf.mxu0
        %v945 = vadd.f32 0.0, %v944
        %946 = vmatmul.f32.gmra.mxu0 %v925
        %v947 = vpop.f32.mrf.mxu0
        %v948 = vadd.f32 0.0, %v947
        %949 = vdwg.mxu0
        %v950 = vadd.f32 %v913, %v945
        %v951 = vadd.f32 %v914, %v948
        %v952 = vld [vmem:[%s8] sm:$0xff]
        %v953 = vld [vmem:[%s8 + $0x8] sm:$0xff]
        %955 = vset.pattern.permute.xlu0 0
        %956 = vperm.xlu0 %955, %v952
        %v957 = vpop.permute.xlu0 %956
        %960 = vset.pattern.permute.xlu0 0
        %961 = vperm.xlu0 %960, %v953
        %v962 = vpop.permute.xlu0 %961
        %v964 = vadd.f32 %v950, %v957
        %v965 = vadd.f32 %v951, %v962
        %v966 = vtanh.pop %v964
        %v967 = vxor.u32 %v965, 2147483648
        %v968 = vmul.f32 %v967, 1.442695
        %v969 = vpow.pop %v968
        %v970 = vadd.f32 %v969, 1.0
        %v971 = vrcp.pop %v970
        %v972 = vmul.f32 %v970, %v971
        %v973 = vsub.f32 1.0, %v972
        %v974 = vmul.f32 %v971, %v973
        %v975 = vadd.f32 %v971, %v974
        %vm976 = vweird.f32 %v970
        %vm977 = vweird.f32 %v971
        %vm978 = vmor %vm976, %vm977
        %v979 = vsel %vm978, %v971, %v975
        %v980 = vand.u32 2147483647, %v970
        %vm981 = vcmp.eq.f32.partialorder %v980, 8.507059e+37
        %v982 = vand.u32 %v970, 2147483648
        %v983 = vor.u32 1.1754944e-38, %v982
        %v984 = vsel %vm981, %v983, %v979
        %v985 = vmul.f32 1.0, %v984
        %v986 = vmul.f32 %v966, %v985
        %v987 = vld [vmem:[%s9] sm:$0xff]
        %v988 = vld [vmem:[%s9 + $0x8] sm:$0xff]
        %v989 = vld [vmem:[%s10] sm:$0xff]
        %v990 = vld [vmem:[%s10 + $0x8] sm:$0xff]
        %992 = vset.pattern.permute.xlu0 0
        %993 = vperm.xlu0 %992, %v989
        %v994 = vpop.permute.xlu0 %993
        %997 = vset.pattern.permute.xlu0 0
        %998 = vperm.xlu0 %997, %v990
        %v999 = vpop.permute.xlu0 %998
        %v1002 = vsel %vm625, %v987, 0
        %v1005 = vsel %vm625, %v988, 0
        %1007 = vmatpush.msra.mxu0 0.0
        %1008 = vmatpush.msra.mxu0 0.0
        %1009 = vmatpush.msra.mxu0 0.0
        %1010 = vmatpush.msra.mxu0 0.0
        %1011 = vmatpush.msra.mxu0 0.0
        %1012 = vmatpush.msra.mxu0 0.0
        %1013 = vmatpush.msra.mxu0 0.0
        %1014 = vmatpush.msra.mxu0 0.0
        %1015 = vmatpush.msra.mxu0 0.0
        %1016 = vmatpush.msra.mxu0 0.0
        %1017 = vmatpush.msra.mxu0 0.0
        %1018 = vmatpush.msra.mxu0 0.0
        %1019 = vmatpush.msra.mxu0 0.0
        %1020 = vmatpush.msra.mxu0 0.0
        %1021 = vmatpush.msra.mxu0 0.0
        %1022 = vmatpush.msra.mxu0 %v986
        %1023 = vmatmul.f32.gmra.mxu0 %v1002
        %v1024 = vpop.f32.mrf.mxu0
        %v1025 = vadd.f32 %v994, %v1024
        %1026 = vmatmul.f32.gmra.mxu0 %v1005
        %v1027 = vpop.f32.mrf.mxu0
        %v1028 = vadd.f32 %v999, %v1027
        %1029 = vdwg.mxu0
        %v1030 = vadd.f32 %v1025, %v882
        %vm1031 = vcmask 130048
        %1032 = vst.msk [vmem:[%s503] sm:$0xff] %vm1031, %v1030
        %1033 = vst.msk [vmem:[%s503 + $0x8] sm:$0xff] %vm1031, %v1028
        %s1034 = sand.u32 %s317, 1
        %s1035 = scalar_lea.sflag [#allocation3], %s1034
        %s1036 = sand.u32 %s317, 1
        %s1037 = smul.addr %s1036, 16
        %s1038 = scalar_lea.vmem [#allocation2], %s1037
        // Predicated region
        $region65: #{tpu_custom_call.1} parent=63 // pred_check
          %p1039 = pneg %p327
        $region66: #{tpu_custom_call.1} parent=63 // pred_check_branch
          %1041 = sbr.rel (%p1039) target = $region68
        $region67: #{tpu_custom_call.1} parent=63 // pred_region
          %1043 = vsyncadd %s1035, 0
          %s1044 = smul.addr %s30, 2
          %s1045 = smul.addr %s29, 32
          %s1046 = sadd.s32 %s1044, %s1045
          %s1047 = smul.addr %s1046, 8
          %s1048 = scalar_lea.hbm %s11, %s1047
          %s1049 = sshll.u32 %s1038, 4
          %s1050 = int_to_ptr.vmem [resolvable:$true] %s1049
          %s1051 = sshll.u32 %s1048, 4
          %s1052 = int_to_ptr.hbm [resolvable:$true] %s1051
          %1057 = dma.vmem_to_hbm [thread:$0]  %s1050, 256, %s1052, %s1035, 128, 128, 8
        $region68: #{tpu_custom_call.1} parent=63 // pred_fallthru
          _
      $region64: #{tpu_custom_call.1} parent=5 // pred_fallthru
        _
      %p1058 = scmp.le.s32.totalorder 2, %s20
      // Predicated region
      $region69: #{tpu_custom_call.1} parent=5 // pred_check
        %p1059 = pneg %p1058
      $region70: #{tpu_custom_call.1} parent=5 // pred_check_branch
        %1061 = sbr.rel (%p1059) target = $region72
      $region71: #{tpu_custom_call.1} parent=5 // pred_region
        %s1062 = ssub.s32 %s20, 2
        // Predicated region
        $region73: #{tpu_custom_call.1} parent=71 // pred_check
          %p1063 = pneg %p333
        $region74: #{tpu_custom_call.1} parent=71 // pred_check_branch
          %1065 = sbr.rel (%p1063) target = $region76
        $region75: #{tpu_custom_call.1} parent=71 // pred_region
          %s1066 = sand.u32 %s318, 1
          %s1067 = scalar_lea.sflag [#allocation3], %s1066
          %s1068 = sand.u32 %s318, 1
          %s1069 = smul.addr %s1068, 16
          %s1070 = scalar_lea.vmem [#allocation2], %s1069
          %1072 = dma.done %s1067, 256
        $region76: #{tpu_custom_call.1} parent=71 // pred_fallthru
          _
      $region72: #{tpu_custom_call.1} parent=5 // pred_fallthru
        _
    $region6: #{tpu_custom_call.1} parent=1 // loop_footer
      %s24 = sadd.s32 1, %s20
    $region7: #{tpu_custom_call.1} parent=1 // loop_footer_branch
      %19 = sbr.rel target = $region3
    $region8: #{tpu_custom_call.1} parent=1 // loop_exit
      _
    %1073 = vsyncpa [#allocation3], 1
    %s1074 = scalar_lea.sflag [#allocation3], 1
    %1075 = vsyncpa %s1074, 1

</llo_original>
